<compile_context>
chip_gen: v6e
topology: v6e:2x2x1
jax: 0.10.0
libtpu: 0.0.40
codegen_flags: <defaults>
</compile_context>

<pallas_src>
import functools

import jax
import jax.numpy as jnp
from jax.experimental import pallas as pl
from jax.experimental.pallas import tpu as pltpu


def _round_up(x, m):
    return ((x + m - 1) // m) * m


def _per_core_vmem_budget():
    """~80% of per-core VMEM; conservative 64 MiB (v7x per-TC) fallback."""
    cap = None
    try:
        info = pltpu.get_tpu_info()
        cap = getattr(info, "vmem_capacity_bytes", None)
    except Exception:
        cap = None
    if not cap:
        cap = 64 << 20
    return int(0.8 * int(cap))


def gated_kernel(h_ref, o_ref, w_ref, v_ref, b_ref, out_ref, *, col_axis):
    # h_ref/o_ref: (tm, Dp) in the input dtype.
    # w_ref/v_ref: (Dp, 2*tn) fused [u | r] weight stripe (matmul dtype).
    # b_ref:       (1, 2*tn) fused bias stripe (f32).
    # out_ref:     (tm, tn).
    tn = w_ref.shape[1] // 2
    col0 = pl.multiple_of(pl.program_id(col_axis) * tn, 128)

    mm_dt = w_ref.dtype
    h_mm = h_ref[...].astype(mm_dt)
    o_mm = o_ref[...].astype(mm_dt)

    # Two wide MXU ops cover both gates; accumulate in f32.
    z = (jnp.dot(h_mm, w_ref[...], preferred_element_type=jnp.float32)
         + jnp.dot(o_mm, v_ref[...], preferred_element_type=jnp.float32)
         + b_ref[...])                                   # (tm, 2*tn) f32

    # sigmoid = 1 / (1 + exp(-z)); exp and approx-reciprocal both go to EUP.
    u = pl.reciprocal(1.0 + jnp.exp(-z[:, :tn]), approx=True)
    r = pl.reciprocal(1.0 + jnp.exp(-z[:, tn:]), approx=True)

    h_c = h_ref[:, pl.ds(col0, tn)].astype(jnp.float32)
    o_c = o_ref[:, pl.ds(col0, tn)].astype(jnp.float32)
    out_ref[...] = (u * h_c + r * o_c).astype(out_ref.dtype)


def prepare_gated_params(w_u, v_u, b_u, w_r, v_r, b_r, *,
                         matmul_dtype=jnp.bfloat16,
                         num_col_blocks=None,
                         vmem_budget_bytes=None):
    """One-time parameter prep: pad to lane width, cast, and fuse the gates.

    Column layout of the fused (Dp, 2*Dp) weights: stripe j (width 2*tn,
    tn = Dp / num_col_blocks) holds [W_u cols j*tn:(j+1)*tn | W_r same cols],
    so a single BlockSpec stripe carries both gates for one output range.
    """
    D = w_u.shape[0]
    Dp = max(128, _round_up(D, 128))
    budget = (_per_core_vmem_budget() if vmem_budget_bytes is None
              else int(vmem_budget_bytes))
    w_item = jnp.dtype(matmul_dtype).itemsize

    if num_col_blocks is None:
        ncb = 1
        while True:
            tn = Dp // ncb
            bufs = 1 if ncb == 1 else 2
            resident = bufs * (2 * Dp * (2 * tn) * w_item + (2 * tn) * 4)
            # Keep <= half the budget resident so activation tiles stay large.
            if resident <= budget // 2 or tn % 256 != 0:
                break
            ncb *= 2
    else:
        ncb = int(num_col_blocks)
        if Dp % ncb != 0 or (Dp // ncb) % 128 != 0:
            raise ValueError("num_col_blocks must split d_pad into multiples of 128")
    tn = Dp // ncb

    def pad_w(w):
        return jnp.pad(w.astype(matmul_dtype), ((0, Dp - D), (0, Dp - D)))

    def fuse_w(a, b):                                    # -> (Dp, 2*Dp)
        a3 = a.reshape(Dp, ncb, tn)
        b3 = b.reshape(Dp, ncb, tn)
        return jnp.stack([a3, b3], axis=2).reshape(Dp, 2 * Dp)

    def fuse_b(a, b):                                    # -> (1, 2*Dp), f32
        a2 = jnp.pad(a.astype(jnp.float32), (0, Dp - D)).reshape(ncb, tn)
        b2 = jnp.pad(b.astype(jnp.float32), (0, Dp - D)).reshape(ncb, tn)
        return jnp.stack([a2, b2], axis=1).reshape(1, 2 * Dp)

    return {
        "w": fuse_w(pad_w(w_u), pad_w(w_r)),   # hidden-side weights
        "v": fuse_w(pad_w(v_u), pad_w(v_r)),   # origin-side weights
        "b": fuse_b(b_u, b_r),
        "d_model": D,
        "d_pad": Dp,
        "num_col_blocks": ncb,
        "matmul_dtype": jnp.dtype(matmul_dtype),
        "vmem_budget_bytes": budget,
    }


def gated_mechanism_apply(params, origin_data, hidden_data, *, tm=512):
    """origin_data: (B, D, S); hidden_data: (B, S, D) -> (B, S, D)."""
    out_dtype = hidden_data.dtype
    B, S, D = hidden_data.shape
    assert D == params["d_model"], "d_model mismatch with prepared params"
    Dp = params["d_pad"]
    ncb = params["num_col_blocks"]
    tn = Dp // ncb
    budget = params["vmem_budget_bytes"]

    # transpose(1, 2) is part of the module's forward semantics.
    # TODO(synk): fold this transpose into the kernel (per-batch grid over the
    # native (B, D, S) layout + transposed dot_general) to save one HBM round
    # trip of `origin`; kept wrapper-side here so XLA can fuse it with the
    # optional lane-padding copy below.
    origin = jnp.swapaxes(origin_data, 1, 2)             # (B, S, D)

    n = B * S
    h2 = hidden_data.reshape(n, D)
    o2 = origin.reshape(n, D)
    if Dp != D:
        # Zero-pad the contraction dim only when it is not lane-aligned (the
        # padded weight rows are zero, so the padding is mathematically inert).
        h2 = jnp.pad(h2, ((0, 0), (0, Dp - D)))
        o2 = jnp.pad(o2, ((0, 0), (0, Dp - D)))

    act_item = jnp.dtype(h2.dtype).itemsize
    out_item = jnp.dtype(out_dtype).itemsize
    w_item = params["matmul_dtype"].itemsize
    w_bufs = 1 if ncb == 1 else 2
    weight_bytes = w_bufs * (2 * Dp * (2 * tn) * w_item + (2 * tn) * 4)

    # Row tile: as large as the per-core VMEM budget allows (multiple of 8).
    tm_eff = min(_round_up(tm, 8), _round_up(n, 8))
    while tm_eff > 8:
        act_bytes = 2 * (2 * tm_eff * Dp * act_item) + 2 * tm_eff * tn * out_item
        if weight_bytes + int(1.25 * act_bytes) <= budget:
            break
        tm_eff = max(8, _round_up(tm_eff // 2, 8))
    act_bytes = 2 * (2 * tm_eff * Dp * act_item) + 2 * tm_eff * tn * out_item
    vmem_limit = int(min(budget,
                         max(weight_bytes + int(1.25 * act_bytes) + (4 << 20),
                             16 << 20)))

    n_row_blocks = (n + tm_eff - 1) // tm_eff

    if ncb == 1:
        # Single weight block: fully resident (single-buffered) across all rows.
        grid = (n_row_blocks, 1)
        col_axis = 1
        row_spec = pl.BlockSpec((tm_eff, Dp), lambda r, c: (r, 0))
        w_spec = pl.BlockSpec((Dp, 2 * tn), lambda r, c: (0, c),
                              pipeline_mode=pl.Buffered(1))
        b_spec = pl.BlockSpec((1, 2 * tn), lambda r, c: (0, c),
                              pipeline_mode=pl.Buffered(1))
        out_spec = pl.BlockSpec((tm_eff, tn), lambda r, c: (r, c))
        semantics = ("parallel", "arbitrary")
    else:
        # Large-D path: weight column stripes on the OUTER axis so each stripe
        # is DMA'd once while row tiles stream underneath (v7x 64 MiB per-TC).
        grid = (ncb, n_row_blocks)
        col_axis = 0
        row_spec = pl.BlockSpec((tm_eff, Dp), lambda c, r: (r, 0))
        w_spec = pl.BlockSpec((Dp, 2 * tn), lambda c, r: (0, c))
        b_spec = pl.BlockSpec((1, 2 * tn), lambda c, r: (0, c))
        out_spec = pl.BlockSpec((tm_eff, tn), lambda c, r: (r, c))
        semantics = ("arbitrary", "arbitrary")

    cost = pl.CostEstimate(
        flops=2 * (2 * n * Dp * 2 * Dp) + 10 * n * D,
        transcendentals=4 * n * D,
        bytes_accessed=(2 * n * Dp * act_item + 4 * Dp * Dp * w_item
                        + 4 * Dp * 4 + n * D * out_item),
    )

    out = pl.pallas_call(
        functools.partial(gated_kernel, col_axis=col_axis),
        out_shape=jax.ShapeDtypeStruct((n, D), out_dtype),
        grid_spec=pltpu.PrefetchScalarGridSpec(
            num_scalar_prefetch=0,
            grid=grid,
            in_specs=[
                row_spec,   # hidden rows
                row_spec,   # origin rows (already transposed)
                w_spec,     # fused [W_u | W_r]
                w_spec,     # fused [V_u | V_r]
                b_spec,     # fused [b_u | b_r] (f32)
            ],
            out_specs=out_spec,
        ),
        compiler_params=pltpu.CompilerParams(
            dimension_semantics=semantics,
            vmem_limit_bytes=vmem_limit,
        ),
        cost_estimate=cost,
    )(h2, o2, params["w"], params["v"], params["b"])

    return out.reshape(B, S, D)


def gated_mechanism(origin_data, hidden_data, w_u, v_u, b_u, w_r, v_r, b_r, *,
                    tm=512, matmul_dtype=jnp.bfloat16, num_col_blocks=None):
    """One-shot convenience wrapper (prefer prepare_gated_params + apply)."""
    params = prepare_gated_params(w_u, v_u, b_u, w_r, v_r, b_r,
                                  matmul_dtype=matmul_dtype,
                                  num_col_blocks=num_col_blocks)
    return gated_mechanism_apply(params, origin_data, hidden_data, tm=tm)


if __name__ == "__main__":
    key = jax.random.PRNGKey(0)
    batch, seq, d_model = 2, 8, 32

    ks = jax.random.split(key, 8)
    origin_data = jax.random.normal(ks[0], (batch, d_model, seq), jnp.float32)
    hidden_data = jax.random.normal(ks[1], (batch, seq, d_model), jnp.float32)
    w_u = jax.random.normal(ks[2], (d_model, d_model), jnp.float32)
    v_u = jax.random.normal(ks[3], (d_model, d_model), jnp.float32)
    b_u = jax.random.normal(ks[4], (d_model,), jnp.float32)
    w_r = jax.random.normal(ks[5], (d_model, d_model), jnp.float32)
    v_r = jax.random.normal(ks[6], (d_model, d_model), jnp.float32)
    b_r = jax.random.normal(ks[7], (d_model,), jnp.float32)

    def reference(o, h, wu, vu, bu, wr, vr, br):
        ot = jnp.swapaxes(o, 1, 2)
        u = jax.nn.sigmoid(h @ wu + ot @ vu + bu)
        r = jax.nn.sigmoid(h @ wr + ot @ vr + br)
        return u * h + r * ot

    ref = reference(origin_data, hidden_data, w_u, v_u, b_u, w_r, v_r, b_r)

    # (1) Default path: bf16 MXU operands, f32 accumulation + f32 epilogue.
    params_bf16 = prepare_gated_params(w_u, v_u, b_u, w_r, v_r, b_r)
    y_bf16 = gated_mechanism_apply(params_bf16, origin_data, hidden_data)
    jax.block_until_ready(y_bf16)
    assert y_bf16.shape == ref.shape
    assert jnp.allclose(y_bf16, ref, atol=2e-1, rtol=2e-1), "bf16 path mismatch"

    # (2) f32 MXU operands: tight check against the pure-JAX reference.
    params_f32 = prepare_gated_params(w_u, v_u, b_u, w_r, v_r, b_r,
                                      matmul_dtype=jnp.float32)
    y_f32 = gated_mechanism_apply(params_f32, origin_data, hidden_data)
    jax.block_until_ready(y_f32)
    assert jnp.allclose(y_f32, ref, atol=2e-2, rtol=2e-2), "f32 path mismatch"

    # (3) Column-striped weights (exercises the large-D / v7x path).
    d2 = 256
    k2 = jax.random.split(jax.random.PRNGKey(1), 8)
    o2d = jax.random.normal(k2[0], (batch, d2, seq), jnp.float32)
    h2d = jax.random.normal(k2[1], (batch, seq, d2), jnp.float32)
    wu2 = jax.random.normal(k2[2], (d2, d2), jnp.float32)
    vu2 = jax.random.normal(k2[3], (d2, d2), jnp.float32)
    bu2 = jax.random.normal(k2[4], (d2,), jnp.float32)
    wr2 = jax.random.normal(k2[5], (d2, d2), jnp.float32)
    vr2 = jax.random.normal(k2[6], (d2, d2), jnp.float32)
    br2 = jax.random.normal(k2[7], (d2,), jnp.float32)
    params_striped = prepare_gated_params(wu2, vu2, bu2, wr2, vr2, br2,
                                          matmul_dtype=jnp.float32,
                                          num_col_blocks=2)
    y_striped = gated_mechanism_apply(params_striped, o2d, h2d)
    jax.block_until_ready(y_striped)
    ref_striped = reference(o2d, h2d, wu2, vu2, bu2, wr2, vr2, br2)
    assert jnp.allclose(y_striped, ref_striped, atol=2e-2, rtol=2e-2), \
        "striped path mismatch"

    # (4) Ragged row count (n % tm != 0): masked partial last row block.
    seq3 = 5
    k3 = jax.random.split(jax.random.PRNGKey(2), 2)
    o3 = jax.random.normal(k3[0], (batch, d_model, seq3), jnp.float32)
    h3 = jax.random.normal(k3[1], (batch, seq3, d_model), jnp.float32)
    y3 = gated_mechanism_apply(params_f32, o3, h3, tm=8)
    jax.block_until_ready(y3)
    ref3 = reference(o3, h3, w_u, v_u, b_u, w_r, v_r, b_r)
    assert jnp.allclose(y3, ref3, atol=2e-2, rtol=2e-2), "ragged-rows mismatch"

    print("KERNEL_OK")
</pallas_src>

<mosaic_0001>
module attributes {stable_mosaic.version = 11 : i64} {
  func.func @gated_kernel(%arg0: i32, %arg1: i32, %arg2: memref<16x128xf32, #tpu.memory_space<vmem>>, %arg3: memref<16x128xf32, #tpu.memory_space<vmem>>, %arg4: memref<128x256xbf16, #tpu.memory_space<vmem>>, %arg5: memref<128x256xbf16, #tpu.memory_space<vmem>>, %arg6: memref<1x256xf32, #tpu.memory_space<vmem>>, %arg7: memref<16x128xf32, #tpu.memory_space<vmem>>) attributes {dimension_semantics = [#tpu.dimension_semantics<parallel>, #tpu.dimension_semantics<arbitrary>], iteration_bounds = array<i64: 1, 1>, scalar_prefetch = 0 : i64, scratch_operands = 0 : i64, tpu.core_type = #tpu.core_type<tc>, window_params = [{transform_indices = @transform_0, window_bounds = array<i64: 16, 128>}, {transform_indices = @transform_1, window_bounds = array<i64: 16, 128>}, {pipeline_mode = #tpu.pipeline_mode<synchronous>, transform_indices = @transform_2, window_bounds = array<i64: 128, 256>}, {pipeline_mode = #tpu.pipeline_mode<synchronous>, transform_indices = @transform_3, window_bounds = array<i64: 128, 256>}, {pipeline_mode = #tpu.pipeline_mode<synchronous>, transform_indices = @transform_4, window_bounds = array<i64: 1, 256>}, {transform_indices = @transform_5, window_bounds = array<i64: 16, 128>}]} {
    %c128_i32 = arith.constant 128 : i32
    %0 = arith.muli %arg1, %c128_i32 : i32
    %1 = tpu.assume_multiple %0, 128 : i32
    %c0 = arith.constant 0 : index
    %c0_0 = arith.constant 0 : index
    %2 = vector.load %arg2[%c0, %c0_0] : memref<16x128xf32, #tpu.memory_space<vmem>>, vector<16x128xf32>
    %3 = arith.truncf %2 : vector<16x128xf32> to vector<16x128xbf16>
    %c0_1 = arith.constant 0 : index
    %c0_2 = arith.constant 0 : index
    %4 = vector.load %arg3[%c0_1, %c0_2] : memref<16x128xf32, #tpu.memory_space<vmem>>, vector<16x128xf32>
    %5 = arith.truncf %4 : vector<16x128xf32> to vector<16x128xbf16>
    %c0_3 = arith.constant 0 : index
    %c0_4 = arith.constant 0 : index
    %6 = vector.load %arg4[%c0_3, %c0_4] : memref<128x256xbf16, #tpu.memory_space<vmem>>, vector<128x256xbf16>
    %cst = arith.constant dense<0.000000e+00> : vector<16x256xf32>
    %7 = tpu.matmul %3, %6, %cst {dimension_numbers = #tpu.dot_dimension_numbers<[1], [0], [0], [1], [0, 0, 1, 1], [], []>} : vector<16x128xbf16>, vector<128x256xbf16>, vector<16x256xf32> -> vector<16x256xf32>
    %c0_5 = arith.constant 0 : index
    %c0_6 = arith.constant 0 : index
    %8 = vector.load %arg5[%c0_5, %c0_6] : memref<128x256xbf16, #tpu.memory_space<vmem>>, vector<128x256xbf16>
    %cst_7 = arith.constant dense<0.000000e+00> : vector<16x256xf32>
    %9 = tpu.matmul %5, %8, %cst_7 {dimension_numbers = #tpu.dot_dimension_numbers<[1], [0], [0], [1], [0, 0, 1, 1], [], []>} : vector<16x128xbf16>, vector<128x256xbf16>, vector<16x256xf32> -> vector<16x256xf32>
    %10 = arith.addf %7, %9 : vector<16x256xf32>
    %c0_8 = arith.constant 0 : index
    %c0_9 = arith.constant 0 : index
    %11 = vector.load %arg6[%c0_8, %c0_9] : memref<1x256xf32, #tpu.memory_space<vmem>>, vector<1x256xf32>
    %12 = vector.broadcast %11 : vector<1x256xf32> to vector<16x256xf32>
    %13 = arith.addf %10, %12 : vector<16x256xf32>
    %14 = vector.extract_strided_slice %13 {offsets = [0, 0], sizes = [16, 128], strides = [1, 1]} : vector<16x256xf32> to vector<16x128xf32>
    %cst_10 = arith.constant 0.000000e+00 : f32
    %15 = vector.broadcast %cst_10 : f32 to vector<16x128xf32>
    %16 = arith.subf %15, %14 : vector<16x128xf32>
    %17 = math.exp %16 : vector<16x128xf32>
    %cst_11 = arith.constant 1.000000e+00 : f32
    %18 = vector.broadcast %cst_11 : f32 to vector<16x128xf32>
    %19 = arith.addf %18, %17 : vector<16x128xf32>
    %20 = tpu.reciprocal %19 {approx = true} : vector<16x128xf32> -> vector<16x128xf32>
    %21 = vector.extract_strided_slice %13 {offsets = [0, 128], sizes = [16, 128], strides = [1, 1]} : vector<16x256xf32> to vector<16x128xf32>
    %cst_12 = arith.constant 0.000000e+00 : f32
    %22 = vector.broadcast %cst_12 : f32 to vector<16x128xf32>
    %23 = arith.subf %22, %21 : vector<16x128xf32>
    %24 = math.exp %23 : vector<16x128xf32>
    %cst_13 = arith.constant 1.000000e+00 : f32
    %25 = vector.broadcast %cst_13 : f32 to vector<16x128xf32>
    %26 = arith.addf %25, %24 : vector<16x128xf32>
    %27 = tpu.reciprocal %26 {approx = true} : vector<16x128xf32> -> vector<16x128xf32>
    %c0_14 = arith.constant 0 : index
    %28 = arith.index_cast %1 : i32 to index
    %29 = vector.load %arg2[%c0_14, %28] : memref<16x128xf32, #tpu.memory_space<vmem>>, vector<16x128xf32>
    %c0_15 = arith.constant 0 : index
    %30 = arith.index_cast %1 : i32 to index
    %31 = vector.load %arg3[%c0_15, %30] : memref<16x128xf32, #tpu.memory_space<vmem>>, vector<16x128xf32>
    %32 = arith.mulf %20, %29 : vector<16x128xf32>
    %33 = arith.mulf %27, %31 : vector<16x128xf32>
    %34 = arith.addf %32, %33 : vector<16x128xf32>
    %c0_16 = arith.constant 0 : index
    %c0_17 = arith.constant 0 : index
    %35 = vector.load %arg7[%c0_16, %c0_17] : memref<16x128xf32, #tpu.memory_space<vmem>>, vector<16x128xf32>
    tpu.vector_store %arg7[%c0_16, %c0_17], %34 {strides = array<i32>} : memref<16x128xf32, #tpu.memory_space<vmem>>, vector<16x128xf32>,
    return
  }
  func.func @transform_0(%arg0: i32, %arg1: i32) -> (i32, i32) {
    %c0_i32 = arith.constant 0 : i32
    %c0_i32_0 = arith.constant 0 : i32
    return %arg0, %c0_i32 : i32, i32
  }
  func.func @transform_1(%arg0: i32, %arg1: i32) -> (i32, i32) {
    %c0_i32 = arith.constant 0 : i32
    %c0_i32_0 = arith.constant 0 : i32
    return %arg0, %c0_i32 : i32, i32
  }
  func.func @transform_2(%arg0: i32, %arg1: i32) -> (i32, i32) {
    %c0_i32 = arith.constant 0 : i32
    %c0_i32_0 = arith.constant 0 : i32
    return %c0_i32, %arg1 : i32, i32
  }
  func.func @transform_3(%arg0: i32, %arg1: i32) -> (i32, i32) {
    %c0_i32 = arith.constant 0 : i32
    %c0_i32_0 = arith.constant 0 : i32
    return %c0_i32, %arg1 : i32, i32
  }
  func.func @transform_4(%arg0: i32, %arg1: i32) -> (i32, i32) {
    %c0_i32 = arith.constant 0 : i32
    %c0_i32_0 = arith.constant 0 : i32
    return %c0_i32, %arg1 : i32, i32
  }
  func.func @transform_5(%arg0: i32, %arg1: i32) -> (i32, i32) {
    %c0_i32 = arith.constant 0 : i32
    return %arg0, %arg1 : i32, i32
  }
}

</mosaic_0001>

<llo_original>
// kernel: tpu_custom_call.1
$region0: #{tpu_custom_call.1}
  #allocation0 [shape = 'u32[]', space=smem, size = 0x4, offset = 0x4, fixed_abs, tag = 'smem constant byte address 0x4 - core index']
  #allocation1 [shape = 'u32[144,128]{1,0:T(1,128)}', space=vmem, size = 0x12000, scoped, tag = 'internal scratch']
  %s0 = inlined_call_operand.hbm [shape: f32[16,128], index: 0, kind: input, shape index: {}]
  %s1 = inlined_call_operand.hbm [shape: f32[16,128], index: 1, kind: input, shape index: {}]
  %s2 = inlined_call_operand.hbm [shape: bf16[128,256], index: 2, kind: input, shape index: {}]
  %s3 = inlined_call_operand.hbm [shape: bf16[128,256], index: 3, kind: input, shape index: {}]
  %s4 = inlined_call_operand.vmem [shape: f32[1,256], index: 4, kind: input, shape index: {}]
  %s5 = inlined_call_operand.hbm [shape: f32[16,32], index: 5, kind: output, shape index: {}]
  %s6 = sld [smem:[#allocation0]]
  $region46: #{tpu_custom_call.1} parent=0
    _
  %s8 = ssub.s32 1, %s6
  %s9 = scalar_select 0, %s8, %s6
  $region1: #{tpu_custom_call.1} parent=0
    #allocation2 [shape = 'u8[8192]{0}', space=vmem, size = 0x2000, scoped, tag = 'input window, operand 0, single buffered']
    #allocation3 [shape = 's32[1]{0}', space=sflag, size = 0x4, scoped, tag = 'scoped memory for tpu_custom_call.1']
    #allocation4 [shape = 's32[1]{0}', space=sflag, size = 0x4, scoped, tag = 'scoped memory for tpu_custom_call.1']
    #allocation5 [shape = 'u8[8192]{0}', space=vmem, size = 0x2000, scoped, tag = 'input window, operand 1, single buffered']
    #allocation6 [shape = 's32[1]{0}', space=sflag, size = 0x4, scoped, tag = 'scoped memory for tpu_custom_call.1']
    #allocation7 [shape = 'u8[65536]{0}', space=vmem, size = 0x10000, scoped, tag = 'input window, operand 2, single buffered']
    #allocation8 [shape = 'u8[65536]{0}', space=vmem, size = 0x10000, scoped, tag = 'input window, operand 3, single buffered']
    #allocation9 [shape = 's32[1]{0}', space=sflag, size = 0x4, scoped, tag = 'scoped memory for tpu_custom_call.1']
    #allocation10 [shape = 'u8[8192]{0}', space=vmem, size = 0x2000, scoped, tag = 'output window, operand 0, single buffered']
    %10 = vsyncpa [#allocation3], 0
    %11 = vsyncpa [#allocation6], 0
    %12 = vsyncpa [#allocation9], 0
    %13 = vsyncpa [#allocation4], 0
    // Predicated region
    $region2: #{tpu_custom_call.1} parent=1 // pred_check
      _
    $region3: #{tpu_custom_call.1} parent=1 // pred_check_branch
      %15 = sbr.rel (0) target = $region5
    $region4: #{tpu_custom_call.1} parent=1 // pred_region
      %s17 = ssub.s32 256, 256
      %18 = vsyncadd [#allocation3], %s17
      %s19 = sshll.u32 [#allocation2], 4
      %s20 = int_to_ptr.vmem [resolvable:$true] %s19
      %25 = dma.hbm_to_vmem [thread:$0]  %s0, 256, %s20, [#allocation3], 128, 128, 8
    $region5: #{tpu_custom_call.1} parent=1 // pred_fallthru
      _
    // Predicated region
    $region6: #{tpu_custom_call.1} parent=1 // pred_check
      _
    $region7: #{tpu_custom_call.1} parent=1 // pred_check_branch
      %27 = sbr.rel (0) target = $region9
    $region8: #{tpu_custom_call.1} parent=1 // pred_region
      %s29 = ssub.s32 256, 256
      %30 = vsyncadd [#allocation6], %s29
      %s31 = sshll.u32 [#allocation5], 4
      %s32 = int_to_ptr.vmem [resolvable:$true] %s31
      %37 = dma.hbm_to_vmem [thread:$0]  %s1, 256, %s32, [#allocation6], 128, 128, 8
    $region9: #{tpu_custom_call.1} parent=1 // pred_fallthru
      _
    // Predicated region
    $region10: #{tpu_custom_call.1} parent=1 // pred_check
      _
    $region11: #{tpu_custom_call.1} parent=1 // pred_check_branch
      %39 = sbr.rel (0) target = $region13
    $region12: #{tpu_custom_call.1} parent=1 // pred_region
      %s41 = ssub.s32 2048, 2048
      %42 = vsyncadd [#allocation6], %s41
      %s43 = sshll.u32 [#allocation7], 4
      %s44 = int_to_ptr.vmem [resolvable:$true] %s43
      %49 = dma.hbm_to_vmem [thread:$0]  %s2, 2048, %s44, [#allocation6], 128, 128, 8
    $region13: #{tpu_custom_call.1} parent=1 // pred_fallthru
      _
    // Predicated region
    $region14: #{tpu_custom_call.1} parent=1 // pred_check
      _
    $region15: #{tpu_custom_call.1} parent=1 // pred_check_branch
      %51 = sbr.rel (0) target = $region17
    $region16: #{tpu_custom_call.1} parent=1 // pred_region
      %s53 = ssub.s32 2048, 2048
      %54 = vsyncadd [#allocation9], %s53
      %s55 = sshll.u32 [#allocation8], 4
      %s56 = int_to_ptr.vmem [resolvable:$true] %s55
      %61 = dma.hbm_to_vmem [thread:$0]  %s3, 2048, %s56, [#allocation9], 128, 128, 8
    $region17: #{tpu_custom_call.1} parent=1 // pred_fallthru
      _
    // Predicated region
    $region18: #{tpu_custom_call.1} parent=1 // pred_check
      _
    $region19: #{tpu_custom_call.1} parent=1 // pred_check_branch
      %63 = sbr.rel (0) target = $region21
    $region20: #{tpu_custom_call.1} parent=1 // pred_region
      _
    $region21: #{tpu_custom_call.1} parent=1 // pred_fallthru
      _
    // Predicated region
    $region22: #{tpu_custom_call.1} parent=1 // pred_check
      _
    $region23: #{tpu_custom_call.1} parent=1 // pred_check_branch
      %65 = sbr.rel (0) target = $region25
    $region24: #{tpu_custom_call.1} parent=1 // pred_region
      %66 = dma.done [#allocation3], 256
    $region25: #{tpu_custom_call.1} parent=1 // pred_fallthru
      _
    // Predicated region
    $region26: #{tpu_custom_call.1} parent=1 // pred_check
      _
    $region27: #{tpu_custom_call.1} parent=1 // pred_check_branch
      %68 = sbr.rel (0) target = $region29
    $region28: #{tpu_custom_call.1} parent=1 // pred_region
      %69 = dma.done [#allocation6], 256
    $region29: #{tpu_custom_call.1} parent=1 // pred_fallthru
      _
    // Predicated region
    $region30: #{tpu_custom_call.1} parent=1 // pred_check
      _
    $region31: #{tpu_custom_call.1} parent=1 // pred_check_branch
      %71 = sbr.rel (0) target = $region33
    $region32: #{tpu_custom_call.1} parent=1 // pred_region
      %72 = dma.done [#allocation6], 2048
    $region33: #{tpu_custom_call.1} parent=1 // pred_fallthru
      _
    // Predicated region
    $region34: #{tpu_custom_call.1} parent=1 // pred_check
      _
    $region35: #{tpu_custom_call.1} parent=1 // pred_check_branch
      %74 = sbr.rel (0) target = $region37
    $region36: #{tpu_custom_call.1} parent=1 // pred_region
      %75 = dma.done [#allocation9], 2048
    $region37: #{tpu_custom_call.1} parent=1 // pred_fallthru
      _
    %s77 = smul.u32 0, 128
    %v78 = vld [vmem:[#allocation2] sm:$0xff]
    %v79 = vld [vmem:[#allocation2 + $0x8] sm:$0xff]
    %v80 = vpack.c.bf16 %v79, %v78
    %v81 = vld [vmem:[#allocation5] sm:$0xff]
    %v82 = vld [vmem:[#allocation5 + $0x8] sm:$0xff]
    %v83 = vpack.c.bf16 %v82, %v81
    %v84 = vld [vmem:[#allocation7] sm:$0xff]
    %v85 = vld [vmem:[#allocation7 + $0x8] sm:$0xff]
    %v86 = vld [vmem:[#allocation7 + $0x10] sm:$0xff]
    %v87 = vld [vmem:[#allocation7 + $0x18] sm:$0xff]
    %v88 = vld [vmem:[#allocation7 + $0x20] sm:$0xff]
    %v89 = vld [vmem:[#allocation7 + $0x28] sm:$0xff]
    %v90 = vld [vmem:[#allocation7 + $0x30] sm:$0xff]
    %v91 = vld [vmem:[#allocation7 + $0x38] sm:$0xff]
    %v92 = vld [vmem:[#allocation7 + $0x40] sm:$0xff]
    %v93 = vld [vmem:[#allocation7 + $0x48] sm:$0xff]
    %v94 = vld [vmem:[#allocation7 + $0x50] sm:$0xff]
    %v95 = vld [vmem:[#allocation7 + $0x58] sm:$0xff]
    %v96 = vld [vmem:[#allocation7 + $0x60] sm:$0xff]
    %v97 = vld [vmem:[#allocation7 + $0x68] sm:$0xff]
    %v98 = vld [vmem:[#allocation7 + $0x70] sm:$0xff]
    %v99 = vld [vmem:[#allocation7 + $0x78] sm:$0xff]
    %v100 = vld [vmem:[#allocation8] sm:$0xff]
    %v101 = vld [vmem:[#allocation8 + $0x8] sm:$0xff]
    %v102 = vld [vmem:[#allocation8 + $0x10] sm:$0xff]
    %v103 = vld [vmem:[#allocation8 + $0x18] sm:$0xff]
    %v104 = vld [vmem:[#allocation8 + $0x20] sm:$0xff]
    %v105 = vld [vmem:[#allocation8 + $0x28] sm:$0xff]
    %v106 = vld [vmem:[#allocation8 + $0x30] sm:$0xff]
    %v107 = vld [vmem:[#allocation8 + $0x38] sm:$0xff]
    %v108 = vld [vmem:[#allocation8 + $0x40] sm:$0xff]
    %v109 = vld [vmem:[#allocation8 + $0x48] sm:$0xff]
    %v110 = vld [vmem:[#allocation8 + $0x50] sm:$0xff]
    %v111 = vld [vmem:[#allocation8 + $0x58] sm:$0xff]
    %v112 = vld [vmem:[#allocation8 + $0x60] sm:$0xff]
    %v113 = vld [vmem:[#allocation8 + $0x68] sm:$0xff]
    %v114 = vld [vmem:[#allocation8 + $0x70] sm:$0xff]
    %v115 = vld [vmem:[#allocation8 + $0x78] sm:$0xff]
    %v132 = vunpack.c.l.b16 %v100
    %v133 = vunpack.c.h.b16 %v100
    %v134 = vunpack.c.l.b16 %v101
    %v135 = vunpack.c.h.b16 %v101
    %v136 = vunpack.c.l.b16 %v102
    %v137 = vunpack.c.h.b16 %v102
    %v138 = vunpack.c.l.b16 %v103
    %v139 = vunpack.c.h.b16 %v103
    %v140 = vunpack.c.l.b16 %v104
    %v141 = vunpack.c.h.b16 %v104
    %v142 = vunpack.c.l.b16 %v105
    %v143 = vunpack.c.h.b16 %v105
    %v144 = vunpack.c.l.b16 %v106
    %v145 = vunpack.c.h.b16 %v106
    %v146 = vunpack.c.l.b16 %v107
    %v147 = vunpack.c.h.b16 %v107
    %v148 = vunpack.c.l.b16 %v108
    %v149 = vunpack.c.h.b16 %v108
    %v150 = vunpack.c.l.b16 %v109
    %v151 = vunpack.c.h.b16 %v109
    %v152 = vunpack.c.l.b16 %v110
    %v153 = vunpack.c.h.b16 %v110
    %v154 = vunpack.c.l.b16 %v111
    %v155 = vunpack.c.h.b16 %v111
    %v156 = vunpack.c.l.b16 %v112
    %v157 = vunpack.c.h.b16 %v112
    %v158 = vunpack.c.l.b16 %v113
    %v159 = vunpack.c.h.b16 %v113
    %v160 = vunpack.c.l.b16 %v114
    %v161 = vunpack.c.h.b16 %v114
    %v162 = vunpack.c.l.b16 %v115
    %v163 = vunpack.c.h.b16 %v115
    %v164 = vpack.c.b16 %v134, %v132
    %v165 = vpack.c.b16 %v135, %v133
    %v166 = vpack.c.b16 %v138, %v136
    %v167 = vpack.c.b16 %v139, %v137
    %v168 = vpack.c.b16 %v142, %v140
    %v169 = vpack.c.b16 %v143, %v141
    %v170 = vpack.c.b16 %v146, %v144
    %v171 = vpack.c.b16 %v147, %v145
    %v172 = vpack.c.b16 %v150, %v148
    %v173 = vpack.c.b16 %v151, %v149
    %v174 = vpack.c.b16 %v154, %v152
    %v175 = vpack.c.b16 %v155, %v153
    %v176 = vpack.c.b16 %v158, %v156
    %v177 = vpack.c.b16 %v159, %v157
    %v178 = vpack.c.b16 %v162, %v160
    %v179 = vpack.c.b16 %v163, %v161
    %196 = vmatprep.subr.bf16.mxu0 %v179
    %197 = vmatpush1.bf16.msra.mxu0 %v178
    %198 = vmatprep.subr.bf16.mxu0 %v177
    %199 = vmatpush1.bf16.msra.mxu0 %v176
    %200 = vmatprep.subr.bf16.mxu0 %v175
    %201 = vmatpush1.bf16.msra.mxu0 %v174
    %202 = vmatprep.subr.bf16.mxu0 %v173
    %203 = vmatpush1.bf16.msra.mxu0 %v172
    %204 = vmatprep.subr.bf16.mxu0 %v171
    %205 = vmatpush1.bf16.msra.mxu0 %v170
    %206 = vmatprep.subr.bf16.mxu0 %v169
    %207 = vmatpush1.bf16.msra.mxu0 %v168
    %208 = vmatprep.subr.bf16.mxu0 %v167
    %209 = vmatpush1.bf16.msra.mxu0 %v166
    %210 = vmatprep.subr.bf16.mxu0 %v165
    %211 = vmatpush1.bf16.msra.mxu0 %v164
    %212 = vmatprep.subr.bf16.mxu0 0
    %213 = vmatpush2.bf16.msra.mxu0 0
    %214 = vmatprep.subr.bf16.mxu0 0
    %215 = vmatpush2.bf16.msra.mxu0 0
    %216 = vmatprep.subr.bf16.mxu0 0
    %217 = vmatpush2.bf16.msra.mxu0 0
    %218 = vmatprep.subr.bf16.mxu0 0
    %219 = vmatpush2.bf16.msra.mxu0 0
    %220 = vmatprep.subr.bf16.mxu0 0
    %221 = vmatpush2.bf16.msra.mxu0 0
    %222 = vmatprep.subr.bf16.mxu0 0
    %223 = vmatpush2.bf16.msra.mxu0 0
    %224 = vmatprep.subr.bf16.mxu0 0
    %225 = vmatpush2.bf16.msra.mxu0 0
    %226 = vmatprep.subr.bf16.mxu0 0
    %227 = vmatpush2.bf16.msra.mxu0 0
    %228 = vmatprep.mubr.bf16.mxu0 0
    %229 = vmatmul.mubr.bf16.gmra.mxu0 %v83
    %v230 = vpop.f32.mrf.mxu0
    %v231 = vadd.f32 0.0, %v230
    %v232 = vpop.f32.mrf.mxu0
    %v233 = vadd.f32 0.0, %v232
    %v234 = vpop.f32.mrf.mxu0
    %v235 = vadd.f32 0.0, %v234
    %v236 = vpop.f32.mrf.mxu0
    %v237 = vadd.f32 0.0, %v236
    %238 = vdwg.mxu0
    %v255 = vunpack.c.l.b16 %v84
    %v256 = vunpack.c.h.b16 %v84
    %v257 = vunpack.c.l.b16 %v85
    %v258 = vunpack.c.h.b16 %v85
    %v259 = vunpack.c.l.b16 %v86
    %v260 = vunpack.c.h.b16 %v86
    %v261 = vunpack.c.l.b16 %v87
    %v262 = vunpack.c.h.b16 %v87
    %v263 = vunpack.c.l.b16 %v88
    %v264 = vunpack.c.h.b16 %v88
    %v265 = vunpack.c.l.b16 %v89
    %v266 = vunpack.c.h.b16 %v89
    %v267 = vunpack.c.l.b16 %v90
    %v268 = vunpack.c.h.b16 %v90
    %v269 = vunpack.c.l.b16 %v91
    %v270 = vunpack.c.h.b16 %v91
    %v271 = vunpack.c.l.b16 %v92
    %v272 = vunpack.c.h.b16 %v92
    %v273 = vunpack.c.l.b16 %v93
    %v274 = vunpack.c.h.b16 %v93
    %v275 = vunpack.c.l.b16 %v94
    %v276 = vunpack.c.h.b16 %v94
    %v277 = vunpack.c.l.b16 %v95
    %v278 = vunpack.c.h.b16 %v95
    %v279 = vunpack.c.l.b16 %v96
    %v280 = vunpack.c.h.b16 %v96
    %v281 = vunpack.c.l.b16 %v97
    %v282 = vunpack.c.h.b16 %v97
    %v283 = vunpack.c.l.b16 %v98
    %v284 = vunpack.c.h.b16 %v98
    %v285 = vunpack.c.l.b16 %v99
    %v286 = vunpack.c.h.b16 %v99
    %v287 = vpack.c.b16 %v257, %v255
    %v288 = vpack.c.b16 %v258, %v256
    %v289 = vpack.c.b16 %v261, %v259
    %v290 = vpack.c.b16 %v262, %v260
    %v291 = vpack.c.b16 %v265, %v263
    %v292 = vpack.c.b16 %v266, %v264
    %v293 = vpack.c.b16 %v269, %v267
    %v294 = vpack.c.b16 %v270, %v268
    %v295 = vpack.c.b16 %v273, %v271
    %v296 = vpack.c.b16 %v274, %v272
    %v297 = vpack.c.b16 %v277, %v275
    %v298 = vpack.c.b16 %v278, %v276
    %v299 = vpack.c.b16 %v281, %v279
    %v300 = vpack.c.b16 %v282, %v280
    %v301 = vpack.c.b16 %v285, %v283
    %v302 = vpack.c.b16 %v286, %v284
    %319 = vmatprep.subr.bf16.mxu0 %v302
    %320 = vmatpush1.bf16.msra.mxu0 %v301
    %321 = vmatprep.subr.bf16.mxu0 %v300
    %322 = vmatpush1.bf16.msra.mxu0 %v299
    %323 = vmatprep.subr.bf16.mxu0 %v298
    %324 = vmatpush1.bf16.msra.mxu0 %v297
    %325 = vmatprep.subr.bf16.mxu0 %v296
    %326 = vmatpush1.bf16.msra.mxu0 %v295
    %327 = vmatprep.subr.bf16.mxu0 %v294
    %328 = vmatpush1.bf16.msra.mxu0 %v293
    %329 = vmatprep.subr.bf16.mxu0 %v292
    %330 = vmatpush1.bf16.msra.mxu0 %v291
    %331 = vmatprep.subr.bf16.mxu0 %v290
    %332 = vmatpush1.bf16.msra.mxu0 %v289
    %333 = vmatprep.subr.bf16.mxu0 %v288
    %334 = vmatpush1.bf16.msra.mxu0 %v287
    %335 = vmatprep.subr.bf16.mxu0 0
    %336 = vmatpush2.bf16.msra.mxu0 0
    %337 = vmatprep.subr.bf16.mxu0 0
    %338 = vmatpush2.bf16.msra.mxu0 0
    %339 = vmatprep.subr.bf16.mxu0 0
    %340 = vmatpush2.bf16.msra.mxu0 0
    %341 = vmatprep.subr.bf16.mxu0 0
    %342 = vmatpush2.bf16.msra.mxu0 0
    %343 = vmatprep.subr.bf16.mxu0 0
    %344 = vmatpush2.bf16.msra.mxu0 0
    %345 = vmatprep.subr.bf16.mxu0 0
    %346 = vmatpush2.bf16.msra.mxu0 0
    %347 = vmatprep.subr.bf16.mxu0 0
    %348 = vmatpush2.bf16.msra.mxu0 0
    %349 = vmatprep.subr.bf16.mxu0 0
    %350 = vmatpush2.bf16.msra.mxu0 0
    %351 = vmatprep.mubr.bf16.mxu0 0
    %352 = vmatmul.mubr.bf16.gmra.mxu0 %v80
    %v353 = vpop.f32.mrf.mxu0
    %v354 = vadd.f32 %v231, %v353
    %v355 = vpop.f32.mrf.mxu0
    %v356 = vadd.f32 %v233, %v355
    %v357 = vpop.f32.mrf.mxu0
    %v358 = vadd.f32 %v235, %v357
    %v359 = vpop.f32.mrf.mxu0
    %v360 = vadd.f32 %v237, %v359
    %361 = vdwg.mxu0
    %v362 = vld [vmem:[%s4] sm:$0x3]
    %v364 = vlaneseq
    %v365 = vshrl.u32 %v364, 7
    %v366 = vsub.s32 0, %v365
    %v367 = vrot.slane %v362, %v366
    %v368 = vlaneseq
    %v369 = vshrl.u32 %v368, 7
    %v370 = vsub.s32 1, %v369
    %v371 = vrot.slane %v362, %v370
    %v374 = vadd.f32 %v354, %v367
    %v375 = vadd.f32 %v356, %v371
    %v376 = vadd.f32 %v358, %v367
    %v377 = vadd.f32 %v360, %v371
    %v378 = vsub.f32 0.0, %v374
    %v379 = vsub.f32 0.0, %v376
    %v380 = vmul.f32 %v378, 1.442695
    %v381 = vpow.pop %v380
    %v382 = vmul.f32 %v379, 1.442695
    %v383 = vpow.pop %v382
    %v384 = vadd.f32 %v381, 1.0
    %v385 = vadd.f32 %v383, 1.0
    %v386 = vrcp.pop %v384
    %v387 = vrcp.pop %v385
    %v388 = vsub.f32 0.0, %v375
    %v389 = vsub.f32 0.0, %v377
    %v390 = vmul.f32 %v388, 1.442695
    %v391 = vpow.pop %v390
    %v392 = vmul.f32 %v389, 1.442695
    %v393 = vpow.pop %v392
    %v394 = vadd.f32 %v391, 1.0
    %v395 = vadd.f32 %v393, 1.0
    %v396 = vrcp.pop %v394
    %v397 = vrcp.pop %v395
    %s398 = sshra.s32 %s77, 7
    %s399 = sand.u32 %s77, 127
    %s400 = scalar_lea.vmem [#allocation2], %s398
    %v401 = vld [vmem:[%s400] sm:$0xff]
    %v402 = vld [vmem:[%s400 + $0x8] sm:$0xff]
    %s403 = scalar_lea.vmem [#allocation5], %s398
    %v404 = vld [vmem:[%s403] sm:$0xff]
    %v405 = vld [vmem:[%s403 + $0x8] sm:$0xff]
    %v406 = vmul.f32 %v386, %v401
    %v407 = vmul.f32 %v387, %v402
    %v408 = vmul.f32 %v396, %v404
    %v409 = vmul.f32 %v397, %v405
    %v410 = vadd.f32 %v406, %v408
    %v411 = vadd.f32 %v407, %v409
    %412 = vst [vmem:[#allocation10] sm:$0xff] %v410
    %413 = vst [vmem:[#allocation10 + $0x8] sm:$0xff] %v411
    // Predicated region
    $region38: #{tpu_custom_call.1} parent=1 // pred_check
      _
    $region39: #{tpu_custom_call.1} parent=1 // pred_check_branch
      %415 = sbr.rel (0) target = $region41
    $region40: #{tpu_custom_call.1} parent=1 // pred_region
      %s417 = ssub.s32 256, 256
      %418 = vsyncadd [#allocation4], %s417
      %s419 = sshll.u32 [#allocation10], 4
      %s420 = int_to_ptr.vmem [resolvable:$true] %s419
      %425 = dma.vmem_to_hbm [thread:$0]  %s420, 256, %s5, [#allocation4], 128, 128, 8
    $region41: #{tpu_custom_call.1} parent=1 // pred_fallthru
      _
    // Predicated region
    $region42: #{tpu_custom_call.1} parent=1 // pred_check
      _
    $region43: #{tpu_custom_call.1} parent=1 // pred_check_branch
      %427 = sbr.rel (0) target = $region45
    $region44: #{tpu_custom_call.1} parent=1 // pred_region
      %428 = dma.done [#allocation4], 256
    $region45: #{tpu_custom_call.1} parent=1 // pred_fallthru
      _
    %429 = vsyncpa [#allocation3], 1
    %430 = vsyncpa [#allocation6], 1
    %431 = vsyncpa [#allocation9], 1
    %432 = vsyncpa [#allocation4], 1

</llo_original>
